<compile_context>
chip_gen: v6e
topology: v6e:2x2x1
jax: 0.10.0
libtpu: 0.0.40
codegen_flags: <defaults>
</compile_context>

<pallas_src>
import functools

import jax
import jax.numpy as jnp
import numpy as np
from jax.experimental import pallas as pl
from jax.experimental.pallas import tpu as pltpu

_LANES = 128
_SUBLANES = 8


def _lane_dense_2d(numel):
    """Return a lane-dense (rows, 128) view shape if the element count allows it."""
    if numel % _LANES == 0 and (numel // _LANES) % _SUBLANES == 0:
        return (numel // _LANES, _LANES)
    return None


# --------------------------------------------------------------------------- #
# Single-step kernel: out = prev + x * rate  (element-wise, VPU)
# --------------------------------------------------------------------------- #
def _step_kernel(prev_ref, x_ref, out_ref, *, rate):
    out_ref[...] = prev_ref[...] + x_ref[...] * jnp.asarray(rate, x_ref.dtype)


def integrate_step(prev_value, x, *, rate):
    """One forward step of SimpleIntegrator. Returns new value (== new state)."""
    orig_shape = x.shape
    numel = int(np.prod(orig_shape))
    slab = _lane_dense_2d(numel)
    if slab is None:
        slab = (1, numel)  # full-array block is still legal for the last two dims
    prev2 = prev_value.reshape(slab)
    x2 = x.reshape(slab)

    out = pl.pallas_call(
        functools.partial(_step_kernel, rate=float(rate)),
        out_shape=jax.ShapeDtypeStruct(x2.shape, x2.dtype),
        in_specs=[
            pl.BlockSpec(memory_space=pltpu.VMEM),  # previous_value (aliased to output)
            pl.BlockSpec(memory_space=pltpu.VMEM),  # x
        ],
        out_specs=pl.BlockSpec(memory_space=pltpu.VMEM),
        input_output_aliases={0: 0},  # state is overwritten in place
    )(prev2, x2)
    return out.reshape(orig_shape)


# --------------------------------------------------------------------------- #
# Fused multi-step kernel: one pallas_call over grid=(T,), state lives in VMEM
# --------------------------------------------------------------------------- #
def _fused_kernel(prev_ref, x_ref, out_ref, state_ref, *, rate):
    @pl.when(pl.program_id(0) == 0)
    def _():
        state_ref[...] = prev_ref[...]

    state_ref[...] = state_ref[...] + x_ref[...] * jnp.asarray(rate, x_ref.dtype)
    out_ref[...] = state_ref[...]


def integrate_sequence(prev_value, xs, *, rate):
    """T fused integration steps.  xs: (T, *shape).  Returns (values, final_state)."""
    T = xs.shape[0]
    orig_shape = xs.shape[1:]
    numel = int(np.prod(orig_shape))
    slab = _lane_dense_2d(numel)
    if slab is None:
        slab = (1, numel)
    R, L = slab

    prev2 = prev_value.reshape(R, L)
    xs2 = xs.reshape(T, R, L)

    out = pl.pallas_call(
        functools.partial(_fused_kernel, rate=float(rate)),
        out_shape=jax.ShapeDtypeStruct((T, R, L), xs.dtype),
        grid_spec=pltpu.PrefetchScalarGridSpec(
            num_scalar_prefetch=0,
            grid=(T,),
            in_specs=[
                # prev: same block every step -> stays VMEM-resident, DMA'd once.
                pl.BlockSpec((R, L), lambda t: (0, 0)),
                # x_t: squeeze the leading T dim so the kernel sees a clean (R, L) tile.
                pl.BlockSpec((pl.Squeezed(), R, L), lambda t: (t, 0, 0)),
            ],
            out_specs=pl.BlockSpec((pl.Squeezed(), R, L), lambda t: (t, 0, 0)),
            scratch_shapes=[pltpu.VMEM((R, L), xs.dtype)],  # running value, VMEM-resident
        ),
        compiler_params=pltpu.CompilerParams(
            dimension_semantics=("arbitrary",),  # sequential carry over T
        ),
    )(prev2, xs2)

    values = out.reshape((T,) + tuple(orig_shape))
    return values, values[-1]


# --------------------------------------------------------------------------- #
# Stateful wrapper mirroring the PyTorch module's semantics
# --------------------------------------------------------------------------- #
class SimpleIntegrator:
    def __init__(self, shape, rate, dtype=jnp.float32):
        # torch.zeros(shape) -> deterministic zero init of the state.
        self.previous_value = jnp.zeros(shape, dtype=dtype)
        self.rate = rate
        self._step = jax.jit(
            functools.partial(integrate_step, rate=rate), donate_argnums=0
        )
        self._seq = jax.jit(
            functools.partial(integrate_sequence, rate=rate), donate_argnums=0
        )

    def __call__(self, x):
        value = self._step(self.previous_value, x)
        self.previous_value = value
        return value

    def forward_sequence(self, xs):
        """Run len(xs) forward() calls fused into one pallas_call."""
        values, final_state = self._seq(self.previous_value, xs)
        self.previous_value = final_state
        return values


if __name__ == "__main__":
    B, C, H, W = 2, 4, 16, 16  # NCHW, small shapes
    rate = 0.5

    key = jax.random.PRNGKey(0)
    k1, k2, k3 = jax.random.split(key, 3)
    x1 = jax.random.normal(k1, (B, C, H, W), dtype=jnp.float32)
    x2 = jax.random.normal(k2, (B, C, H, W), dtype=jnp.float32)

    # --- per-step path (kernel + in-place state update) ---------------------
    integrator = SimpleIntegrator((B, C, H, W), rate)
    out1 = integrator(x1)
    # copy to host before the next step donates/reuses this buffer
    out1_host = np.asarray(jax.block_until_ready(out1))
    out2 = integrator(x2)
    out2_host = np.asarray(jax.block_until_ready(out2))

    ref1 = np.asarray(x1) * rate
    ref2 = ref1 + np.asarray(x2) * rate
    assert np.allclose(out1_host, ref1, atol=1e-6), "step-1 mismatch"
    assert np.allclose(out2_host, ref2, atol=1e-6), "step-2 mismatch"

    # --- fused multi-step path (one pallas_call for T steps) ----------------
    T = 8
    xs = jax.random.normal(k3, (T, B, C, H, W), dtype=jnp.float32)
    integ2 = SimpleIntegrator((B, C, H, W), rate)
    vals = integ2.forward_sequence(xs)
    vals = jax.block_until_ready(vals)

    ref_seq = np.cumsum(np.asarray(xs) * rate, axis=0)
    assert np.allclose(np.asarray(vals), ref_seq, atol=1e-5), "fused seq mismatch"
    assert np.allclose(
        np.asarray(integ2.previous_value), ref_seq[-1], atol=1e-5
    ), "fused final-state mismatch"

    print("KERNEL_OK")
</pallas_src>

<mosaic_0001>
module attributes {stable_mosaic.version = 11 : i64} {
  func.func @_step_kernel(%arg0: memref<16x128xf32, #tpu.memory_space<vmem>>, %arg1: memref<16x128xf32, #tpu.memory_space<vmem>>, %arg2: memref<16x128xf32, #tpu.memory_space<vmem>>) attributes {dimension_semantics = [], scalar_prefetch = 0 : i64, scratch_operands = 0 : i64, tpu.core_type = #tpu.core_type<tc>} {
    %c0 = arith.constant 0 : index
    %c0_0 = arith.constant 0 : index
    %0 = vector.load %arg0[%c0, %c0_0] : memref<16x128xf32, #tpu.memory_space<vmem>>, vector<16x128xf32>
    %c0_1 = arith.constant 0 : index
    %c0_2 = arith.constant 0 : index
    %1 = vector.load %arg1[%c0_1, %c0_2] : memref<16x128xf32, #tpu.memory_space<vmem>>, vector<16x128xf32>
    %cst = arith.constant 5.000000e-01 : f32
    %2 = vector.broadcast %cst : f32 to vector<16x128xf32>
    %3 = arith.mulf %1, %2 : vector<16x128xf32>
    %4 = arith.addf %0, %3 : vector<16x128xf32>
    %c0_3 = arith.constant 0 : index
    %c0_4 = arith.constant 0 : index
    %5 = vector.load %arg2[%c0_3, %c0_4] : memref<16x128xf32, #tpu.memory_space<vmem>>, vector<16x128xf32>
    tpu.vector_store %arg2[%c0_3, %c0_4], %4 {strides = array<i32>} : memref<16x128xf32, #tpu.memory_space<vmem>>, vector<16x128xf32>,
    return
  }
}

</mosaic_0001>

<llo_original>
// kernel: integrate_step.1
$region0: #{integrate_step.1}
  #allocation0 [shape = 'u32[]', space=smem, size = 0x4, offset = 0x4, fixed_abs, tag = 'smem constant byte address 0x4 - core index']
  #allocation1 [shape = 'u32[144,128]{1,0:T(1,128)}', space=vmem, size = 0x12000, scoped, tag = 'internal scratch']
  %s0 = inlined_call_operand.vmem [shape: f32[16,128], index: 0, kind: input, shape index: {}, may-alias: {0,2}]
  %s1 = inlined_call_operand.vmem [shape: f32[16,128], index: 1, kind: input, shape index: {}]
  %s2 = inlined_call_operand.vmem [shape: f32[16,128], index: 2, kind: output, shape index: {}, may-alias: {0,2}]
  %s3 = sld [smem:[#allocation0]]
  $region18: #{integrate_step.1} parent=0
    _
  %s5 = ssub.s32 1, %s3
  %s6 = scalar_select 0, %s5, %s3
  // Predicated region
  $region2: #{integrate_step.1} parent=0 // pred_check
    _
  $region3: #{integrate_step.1} parent=0 // pred_check_branch
    %8 = sbr.rel (0) target = $region5
  $region4: #{integrate_step.1} parent=0 // pred_region
    _
  $region5: #{integrate_step.1} parent=0 // pred_fallthru
    _
  // Predicated region
  $region6: #{integrate_step.1} parent=0 // pred_check
    _
  $region7: #{integrate_step.1} parent=0 // pred_check_branch
    %10 = sbr.rel (0) target = $region9
  $region8: #{integrate_step.1} parent=0 // pred_region
    _
  $region9: #{integrate_step.1} parent=0 // pred_fallthru
    _
  %v11 = vld [vmem:[%s0] sm:$0xff]
  %v12 = vld [vmem:[%s0 + $0x8] sm:$0xff]
  %v13 = vld [vmem:[%s1] sm:$0xff]
  %v14 = vld [vmem:[%s1 + $0x8] sm:$0xff]
  %v15 = vmul.f32 %v13, 0.5
  %v16 = vmul.f32 %v14, 0.5
  %v17 = vadd.f32 %v11, %v15
  %v18 = vadd.f32 %v12, %v16
  %19 = vst [vmem:[%s2] sm:$0xff] %v17
  %20 = vst [vmem:[%s2 + $0x8] sm:$0xff] %v18
  // Predicated region
  $region10: #{integrate_step.1} parent=0 // pred_check
    _
  $region11: #{integrate_step.1} parent=0 // pred_check_branch
    %22 = sbr.rel (0) target = $region13
  $region12: #{integrate_step.1} parent=0 // pred_region
    _
  $region13: #{integrate_step.1} parent=0 // pred_fallthru
    _
  // Predicated region
  $region14: #{integrate_step.1} parent=0 // pred_check
    _
  $region15: #{integrate_step.1} parent=0 // pred_check_branch
    %24 = sbr.rel (0) target = $region17
  $region16: #{integrate_step.1} parent=0 // pred_region
    _
  $region17: #{integrate_step.1} parent=0 // pred_fallthru
    _

</llo_original>
